<compile_context>
chip_gen: v7x
topology: tpu7x:2x2x1
jax: 0.10.0
libtpu: 0.0.40
codegen_flags: <defaults>
</compile_context>

<pallas_src>
import functools

import jax
import jax.numpy as jnp
from jax.experimental import pallas as pl
from jax.experimental.pallas import tpu as pltpu


def _round_up(x, m):
    return (x + m - 1) // m * m


# ---------------------------------------------------------------------------
# Phase 1: per-feature sum and sum-of-squares over row tiles.
# ---------------------------------------------------------------------------
def _stats_kernel(x_ref, sum_ref, sq_ref):
    # grid = (feature_tiles, row_tiles); row axis (axis 1) is the reduction.
    @pl.when(pl.program_id(1) == 0)
    def _():
        sum_ref[...] = jnp.zeros_like(sum_ref)
        sq_ref[...] = jnp.zeros_like(sq_ref)

    x = x_ref[...].astype(jnp.float32)
    sum_ref[...] += jnp.sum(x, axis=0, keepdims=True)
    sq_ref[...] += jnp.sum(x * x, axis=0, keepdims=True)


# ---------------------------------------------------------------------------
# Phase 2: apply normalization (fused scale/shift), sigmoid, folded blend.
# ---------------------------------------------------------------------------
def _apply_kernel(x_ref, scale_ref, shift_ref, alpha_ref, oma_ref, o_ref):
    x = x_ref[...].astype(jnp.float32)
    x_norm = x * scale_ref[...] + shift_ref[...]          # fused BN affine
    x_p = jax.nn.sigmoid(x_norm)                          # EUP
    gate = alpha_ref[...] + oma_ref[...] * x_p            # alpha + (1-alpha)*x_p
    o_ref[...] = (x * gate).astype(o_ref.dtype)


def _dice_2d(x, gamma, beta, alpha, eps):
    """x: [N, E]; gamma/beta/alpha: [E]."""
    n, e = x.shape

    # Lane-dense feature tiling: pad E to a multiple of 128, pick a fat tile.
    e_pad = _round_up(e, 128)
    if e_pad % 512 == 0:
        te = 512
    elif e_pad % 256 == 0:
        te = 256
    else:
        te = 128

    # Row tiling: bounded VMEM footprint regardless of batch size.
    tn = min(512, _round_up(n, 8))
    n_pad = _round_up(n, tn)

    x_padded = x
    if (n_pad, e_pad) != (n, e):
        x_padded = jnp.pad(x, ((0, n_pad - n), (0, e_pad - e)))

    n_row_tiles = n_pad // tn
    n_feat_tiles = e_pad // te

    compiler_params_stats = pltpu.CompilerParams(
        dimension_semantics=("parallel", "arbitrary"),
        vmem_limit_bytes=48 * 1024 * 1024,
    )
    compiler_params_apply = pltpu.CompilerParams(
        dimension_semantics=("parallel", "parallel"),
        vmem_limit_bytes=48 * 1024 * 1024,
    )

    # --- Phase 1: streamed sum / sum-of-squares -----------------------------
    sums, sqs = pl.pallas_call(
        _stats_kernel,
        out_shape=(
            jax.ShapeDtypeStruct((1, e_pad), jnp.float32),
            jax.ShapeDtypeStruct((1, e_pad), jnp.float32),
        ),
        grid_spec=pl.GridSpec(
            grid=(n_feat_tiles, n_row_tiles),
            in_specs=[
                pl.BlockSpec((tn, te), lambda j, i: (i, j)),
            ],
            out_specs=(
                pl.BlockSpec((1, te), lambda j, i: (0, j)),
                pl.BlockSpec((1, te), lambda j, i: (0, j)),
            ),
        ),
        compiler_params=compiler_params_stats,
    )(x_padded)

    # --- Tiny per-feature prep (E-sized, plain JAX) --------------------------
    # NOTE: var = E[x^2] - mean^2 in f32; acceptable cancellation for typical
    # normalized inputs (matches biased/training-mode BatchNorm variance).
    inv_n = jnp.float32(1.0 / n)
    mean = sums * inv_n                                    # (1, e_pad)
    var = sqs * inv_n - mean * mean
    inv_std = jax.lax.rsqrt(var + jnp.float32(eps))

    def _pad_vec(v):
        v = v.reshape(1, e).astype(jnp.float32)
        if e_pad != e:
            v = jnp.pad(v, ((0, 0), (0, e_pad - e)))
        return v

    gamma_p = _pad_vec(gamma)
    beta_p = _pad_vec(beta)
    alpha_p = _pad_vec(alpha)

    scale = gamma_p * inv_std                              # gamma / sqrt(var+eps)
    shift = beta_p - mean * scale                          # beta - mean*scale
    one_minus_alpha = 1.0 - alpha_p

    # --- Phase 2: streamed apply ---------------------------------------------
    vec_spec = pl.BlockSpec((1, te), lambda j, i: (0, j))
    out_padded = pl.pallas_call(
        _apply_kernel,
        out_shape=jax.ShapeDtypeStruct((n_pad, e_pad), x.dtype),
        grid_spec=pl.GridSpec(
            grid=(n_feat_tiles, n_row_tiles),
            in_specs=[
                pl.BlockSpec((tn, te), lambda j, i: (i, j)),
                vec_spec,   # scale
                vec_spec,   # shift
                vec_spec,   # alpha
                vec_spec,   # 1 - alpha
            ],
            out_specs=pl.BlockSpec((tn, te), lambda j, i: (i, j)),
        ),
        compiler_params=compiler_params_apply,
    )(x_padded, scale, shift, alpha_p, one_minus_alpha)

    if (n_pad, e_pad) != (n, e):
        out_padded = out_padded[:n, :e]
    return out_padded


def dice_forward(x, gamma, beta, alpha, *, dim, eps=1e-8):
    """Pallas implementation of Dice.forward.

    dim == 2: x [B, E],      alpha [E]
    dim == 3: x [B, F, E],   alpha [E, 1]  (per-embedding-channel)
    """
    assert x.ndim == dim
    if dim == 2:
        return _dice_2d(x, gamma, beta, alpha, eps)
    else:
        b, f, e = x.shape
        alpha_vec = alpha.reshape(e)
        x2 = x.reshape(b * f, e)
        out2 = _dice_2d(x2, gamma, beta, alpha_vec, eps)
        return out2.reshape(b, f, e)


# TODO(synk): BatchNorm1d running_mean/running_var buffer updates (a
# training-time side effect) are not materialized; they do not affect the
# forward output in training mode.


# ---------------------------------------------------------------------------
# Pure-JAX reference (mirrors the PyTorch forward, training-mode BN).
# ---------------------------------------------------------------------------
def dice_reference(x, gamma, beta, alpha, *, dim, eps=1e-8):
    if dim == 2:
        mean = jnp.mean(x, axis=0, keepdims=True)
        var = jnp.mean((x - mean) ** 2, axis=0, keepdims=True)
        x_p = jax.nn.sigmoid((x - mean) / jnp.sqrt(var + eps) * gamma + beta)
        return alpha * (1 - x_p) * x + x_p * x
    else:
        xt = jnp.transpose(x, (0, 2, 1))                 # [B, E, F]
        mean = jnp.mean(xt, axis=(0, 2), keepdims=True)  # per channel E
        var = jnp.mean((xt - mean) ** 2, axis=(0, 2), keepdims=True)
        xn = (xt - mean) / jnp.sqrt(var + eps)
        xn = xn * gamma[None, :, None] + beta[None, :, None]
        x_p = jax.nn.sigmoid(xn)
        out = alpha[None, :, :] * (1 - x_p) * xt + x_p * xt
        return jnp.transpose(out, (0, 2, 1))


if __name__ == "__main__":
    key = jax.random.PRNGKey(0)
    k1, k2, k3 = jax.random.split(key, 3)

    EMB = 32
    EPS = 1e-8

    # Deterministic parameter init (shapes from Dice.__init__):
    #   bn.weight=1, bn.bias=0, alpha zeros in the module; use small
    #   deterministic nonzero alpha so the full formula is exercised.
    gamma = jnp.ones((EMB,), jnp.float32)
    beta = jnp.zeros((EMB,), jnp.float32)
    alpha2 = 0.1 * jax.random.normal(k3, (EMB,), jnp.float32)      # dim=2
    alpha3 = alpha2.reshape(EMB, 1)                                 # dim=3

    # dim == 2 case: [batch, emb]
    x2 = jax.random.normal(k1, (8, EMB), jnp.float32)
    out2 = dice_forward(x2, gamma, beta, alpha2, dim=2, eps=EPS)
    out2 = jax.block_until_ready(out2)
    ref2 = dice_reference(x2, gamma, beta, alpha2, dim=2, eps=EPS)
    assert out2.shape == x2.shape
    assert jnp.allclose(out2, ref2, atol=1e-5, rtol=1e-5), "dim=2 mismatch"

    # dim == 3 case: [batch, num_features, emb]
    x3 = jax.random.normal(k2, (2, 8, EMB), jnp.float32)
    out3 = dice_forward(x3, gamma, beta, alpha3, dim=3, eps=EPS)
    out3 = jax.block_until_ready(out3)
    ref3 = dice_reference(x3, gamma, beta, alpha3, dim=3, eps=EPS)
    assert out3.shape == x3.shape
    assert jnp.allclose(out3, ref3, atol=1e-5, rtol=1e-5), "dim=3 mismatch"

    print("KERNEL_OK")
</pallas_src>

<mosaic_0001>
module attributes {stable_mosaic.version = 11 : i64} {
  func.func @_stats_kernel(%arg0: i32, %arg1: i32, %arg2: memref<8x128xf32, #tpu.memory_space<vmem>>, %arg3: memref<1x128xf32, #tpu.memory_space<vmem>>, %arg4: memref<1x128xf32, #tpu.memory_space<vmem>>) attributes {dimension_semantics = [#tpu.dimension_semantics<parallel>, #tpu.dimension_semantics<arbitrary>], iteration_bounds = array<i64: 1, 1>, scalar_prefetch = 0 : i64, scratch_operands = 0 : i64, tpu.core_type = #tpu.core_type<tc>, window_params = [{transform_indices = @transform_0, window_bounds = array<i64: 8, 128>}, {transform_indices = @transform_1, window_bounds = array<i64: 1, 128>}, {transform_indices = @transform_2, window_bounds = array<i64: 1, 128>}]} {
    %c0_i32 = arith.constant 0 : i32
    %0 = arith.cmpi eq, %arg1, %c0_i32 : i32
    %1 = arith.extui %0 : i1 to i32
    %c0_i32_0 = arith.constant 0 : i32
    %2 = arith.cmpi ne, %1, %c0_i32_0 : i32
    scf.if %2 {
      %cst_11 = arith.constant 0.000000e+00 : f32
      %15 = vector.broadcast %cst_11 : f32 to vector<1x128xf32>
      %c0_12 = arith.constant 0 : index
      %c0_13 = arith.constant 0 : index
      %16 = vector.load %arg3[%c0_12, %c0_13] : memref<1x128xf32, #tpu.memory_space<vmem>>, vector<1x128xf32>
      tpu.vector_store %arg3[%c0_12, %c0_13], %15 {strides = array<i32>} : memref<1x128xf32, #tpu.memory_space<vmem>>, vector<1x128xf32>,
      %cst_14 = arith.constant 0.000000e+00 : f32
      %17 = vector.broadcast %cst_14 : f32 to vector<1x128xf32>
      %c0_15 = arith.constant 0 : index
      %c0_16 = arith.constant 0 : index
      %18 = vector.load %arg4[%c0_15, %c0_16] : memref<1x128xf32, #tpu.memory_space<vmem>>, vector<1x128xf32>
      tpu.vector_store %arg4[%c0_15, %c0_16], %17 {strides = array<i32>} : memref<1x128xf32, #tpu.memory_space<vmem>>, vector<1x128xf32>,
    } else {
    }
    %c0 = arith.constant 0 : index
    %c0_1 = arith.constant 0 : index
    %3 = vector.load %arg2[%c0, %c0_1] : memref<8x128xf32, #tpu.memory_space<vmem>>, vector<8x128xf32>
    %c0_2 = arith.constant 0 : index
    %c0_3 = arith.constant 0 : index
    %4 = vector.load %arg3[%c0_2, %c0_3] : memref<1x128xf32, #tpu.memory_space<vmem>>, vector<1x128xf32>
    %cst = arith.constant dense<0.000000e+00> : vector<128xf32>
    %5 = vector.multi_reduction <add>, %3, %cst [0] : vector<8x128xf32> to vector<128xf32>
    %6 = vector.shape_cast %5 : vector<128xf32> to vector<1x128xf32>
    %7 = arith.addf %4, %6 : vector<1x128xf32>
    %c0_4 = arith.constant 0 : index
    %c0_5 = arith.constant 0 : index
    %8 = vector.load %arg3[%c0_4, %c0_5] : memref<1x128xf32, #tpu.memory_space<vmem>>, vector<1x128xf32>
    tpu.vector_store %arg3[%c0_4, %c0_5], %7 {strides = array<i32>} : memref<1x128xf32, #tpu.memory_space<vmem>>, vector<1x128xf32>,
    %c0_6 = arith.constant 0 : index
    %c0_7 = arith.constant 0 : index
    %9 = vector.load %arg4[%c0_6, %c0_7] : memref<1x128xf32, #tpu.memory_space<vmem>>, vector<1x128xf32>
    %10 = arith.mulf %3, %3 : vector<8x128xf32>
    %cst_8 = arith.constant dense<0.000000e+00> : vector<128xf32>
    %11 = vector.multi_reduction <add>, %10, %cst_8 [0] : vector<8x128xf32> to vector<128xf32>
    %12 = vector.shape_cast %11 : vector<128xf32> to vector<1x128xf32>
    %13 = arith.addf %9, %12 : vector<1x128xf32>
    %c0_9 = arith.constant 0 : index
    %c0_10 = arith.constant 0 : index
    %14 = vector.load %arg4[%c0_9, %c0_10] : memref<1x128xf32, #tpu.memory_space<vmem>>, vector<1x128xf32>
    tpu.vector_store %arg4[%c0_9, %c0_10], %13 {strides = array<i32>} : memref<1x128xf32, #tpu.memory_space<vmem>>, vector<1x128xf32>,
    return
  }
  func.func @transform_0(%arg0: i32, %arg1: i32) -> (i32, i32) {
    %c0_i32 = arith.constant 0 : i32
    return %arg1, %arg0 : i32, i32
  }
  func.func @transform_1(%arg0: i32, %arg1: i32) -> (i32, i32) {
    %c0_i32 = arith.constant 0 : i32
    %c0_i32_0 = arith.constant 0 : i32
    return %c0_i32, %arg0 : i32, i32
  }
  func.func @transform_2(%arg0: i32, %arg1: i32) -> (i32, i32) {
    %c0_i32 = arith.constant 0 : i32
    %c0_i32_0 = arith.constant 0 : i32
    return %c0_i32, %arg0 : i32, i32
  }
}

</mosaic_0001>

<llo_original>
// kernel: tpu_custom_call.1
$region0: #{tpu_custom_call.1}
  #allocation0 [shape = 'u32[]', space=smem, size = 0x4, offset = 0x4, fixed_abs, tag = 'smem constant byte address 0x4 - core index']
  #allocation1 [shape = 'u32[144,128]{1,0:T(1,128)}', space=vmem, size = 0x12000, scoped, tag = 'internal scratch']
  %s0 = inlined_call_operand.hbm [shape: f32[8,128], index: 0, kind: input, shape index: {}]
  %s1 = inlined_call_operand.hbm [shape: f32[1,128], index: 1, kind: output, shape index: {0}]
  %s2 = inlined_call_operand.hbm [shape: f32[1,128], index: 2, kind: output, shape index: {1}]
  %3 = xla_tuple %s1, %s2
  %s4 = sld [smem:[#allocation0]]
  $region30: #{tpu_custom_call.1} parent=0
    _
  %s6 = ssub.s32 1, %s4
  %s7 = scalar_select 0, %s6, %s4
  $region1: #{tpu_custom_call.1} parent=0
    #allocation2 [shape = 'u8[4096]{0}', space=vmem, size = 0x1000, scoped, tag = 'input window, operand 0, single buffered']
    #allocation3 [shape = 's32[1]{0}', space=sflag, size = 0x4, scoped, tag = 'scoped memory for tpu_custom_call.1']
    #allocation4 [shape = 's32[1]{0}', space=sflag, size = 0x4, scoped, tag = 'scoped memory for tpu_custom_call.1']
    #allocation5 [shape = 'u8[512]{0}', space=vmem, size = 0x400, scoped, tag = 'output window, operand 0, single buffered']
    #allocation6 [shape = 'u8[512]{0}', space=vmem, size = 0x400, scoped, tag = 'output window, operand 1, single buffered']
    #allocation7 [shape = 's32[1]{0}', space=sflag, size = 0x4, scoped, tag = 'scoped memory for tpu_custom_call.1']
    %8 = vsyncpa [#allocation3], 0
    %9 = vsyncpa [#allocation4], 0
    %10 = vsyncpa [#allocation7], 0
    // Predicated region
    $region2: #{tpu_custom_call.1} parent=1 // pred_check
      _
    $region3: #{tpu_custom_call.1} parent=1 // pred_check_branch
      %12 = sbr.rel (0) target = $region5
    $region4: #{tpu_custom_call.1} parent=1 // pred_region
      %s14 = ssub.s32 128, 128
      %15 = vsyncadd [#allocation3], %s14
      %s17 = sshll.u32 [#allocation2], 4
      %s18 = int_to_ptr.vmem [resolvable:$true] %s17
      %20 = dma.hbm_to_vmem [thread:$0]  %s0, 128, %s18, [#allocation3]
    $region5: #{tpu_custom_call.1} parent=1 // pred_fallthru
      _
    // Predicated region
    $region6: #{tpu_custom_call.1} parent=1 // pred_check
      _
    $region7: #{tpu_custom_call.1} parent=1 // pred_check_branch
      %22 = sbr.rel (0) target = $region9
    $region8: #{tpu_custom_call.1} parent=1 // pred_region
      %23 = dma.done [#allocation3], 128
    $region9: #{tpu_custom_call.1} parent=1 // pred_fallthru
      _
    %p24 = scmp.eq.s32.totalorder 0, 0
    // Predicated region
    $region10: #{tpu_custom_call.1} parent=1 // pred_check
      %p25 = pneg %p24
    $region11: #{tpu_custom_call.1} parent=1 // pred_check_branch
      %27 = sbr.rel (%p25) target = $region13
    $region12: #{tpu_custom_call.1} parent=1 // pred_region
      %28 = vst [vmem:[#allocation5] sm:$0x1] 0.0
      %29 = vst [vmem:[#allocation6] sm:$0x1] 0.0
    $region13: #{tpu_custom_call.1} parent=1 // pred_fallthru
      _
    %v30 = vld [vmem:[#allocation2] sm:$0xff]
    %v31 = vld [vmem:[#allocation5] sm:$0x1]
    %v32 = vrot.slane %v30, 4
    %v33 = vadd.f32 %v30, %v32
    %v34 = vrot.slane %v33, 2
    %v35 = vadd.f32 %v33, %v34
    %v36 = vrot.slane %v35, 1
    %v37 = vadd.f32 %v35, %v36
    %v38 = vadd.f32 %v31, %v37
    %39 = vst [vmem:[#allocation5] sm:$0x1] %v38
    %v40 = vld [vmem:[#allocation6] sm:$0x1]
    %v41 = vmul.f32 %v30, %v30
    %v42 = vrot.slane %v41, 4
    %v43 = vadd.f32 %v41, %v42
    %v44 = vrot.slane %v43, 2
    %v45 = vadd.f32 %v43, %v44
    %v46 = vrot.slane %v45, 1
    %v47 = vadd.f32 %v45, %v46
    %v48 = vadd.f32 %v40, %v47
    %49 = vst [vmem:[#allocation6] sm:$0x1] %v48
    // Predicated region
    $region14: #{tpu_custom_call.1} parent=1 // pred_check
      _
    $region15: #{tpu_custom_call.1} parent=1 // pred_check_branch
      %51 = sbr.rel (0) target = $region17
    $region16: #{tpu_custom_call.1} parent=1 // pred_region
      %s53 = ssub.s32 16, 16
      %54 = vsyncadd [#allocation4], %s53
      %s56 = sshll.u32 [#allocation5], 4
      %s57 = int_to_ptr.vmem [resolvable:$true] %s56
      %59 = dma.vmem_to_hbm [thread:$0]  %s57, 16, %s1, [#allocation4]
    $region17: #{tpu_custom_call.1} parent=1 // pred_fallthru
      _
    // Predicated region
    $region18: #{tpu_custom_call.1} parent=1 // pred_check
      _
    $region19: #{tpu_custom_call.1} parent=1 // pred_check_branch
      %61 = sbr.rel (0) target = $region21
    $region20: #{tpu_custom_call.1} parent=1 // pred_region
      %s63 = ssub.s32 16, 16
      %64 = vsyncadd [#allocation7], %s63
      %s66 = sshll.u32 [#allocation6], 4
      %s67 = int_to_ptr.vmem [resolvable:$true] %s66
      %69 = dma.vmem_to_hbm [thread:$0]  %s67, 16, %s2, [#allocation7]
    $region21: #{tpu_custom_call.1} parent=1 // pred_fallthru
      _
    // Predicated region
    $region22: #{tpu_custom_call.1} parent=1 // pred_check
      _
    $region23: #{tpu_custom_call.1} parent=1 // pred_check_branch
      %71 = sbr.rel (0) target = $region25
    $region24: #{tpu_custom_call.1} parent=1 // pred_region
      %72 = dma.done [#allocation4], 16
    $region25: #{tpu_custom_call.1} parent=1 // pred_fallthru
      _
    // Predicated region
    $region26: #{tpu_custom_call.1} parent=1 // pred_check
      _
    $region27: #{tpu_custom_call.1} parent=1 // pred_check_branch
      %74 = sbr.rel (0) target = $region29
    $region28: #{tpu_custom_call.1} parent=1 // pred_region
      %75 = dma.done [#allocation7], 16
    $region29: #{tpu_custom_call.1} parent=1 // pred_fallthru
      _
    %76 = vsyncpa [#allocation3], 1
    %77 = vsyncpa [#allocation4], 1
    %78 = vsyncpa [#allocation7], 1

</llo_original>
